<compile_context>
chip_gen: v5e
topology: v5e:2x2
jax: 0.10.0
libtpu: 0.0.40
codegen_flags: <defaults>
</compile_context>

<pallas_src>
import functools

import jax
import jax.numpy as jnp
from jax.experimental import pallas as pl
from jax.experimental.pallas import tpu as pltpu

_EPS = 1e-5  # torch.nn.GroupNorm default


def _cdiv(a, b):
    return -(-a // b)


def _round_up(a, b):
    return _cdiv(a, b) * b


def _vmem_capacity_bytes():
    try:
        info = pltpu.get_tpu_info()
        cap = getattr(info, "vmem_capacity_bytes", None)
        if cap:
            return int(cap)
    except Exception:
        pass
    return 64 * 1024 * 1024  # conservative (v7x) fallback


def _default_compute_dtype():
    # v5e: MXU is much faster with bf16 operands (f32 accumulation is kept regardless).
    try:
        kind = jax.devices()[0].device_kind.lower()
    except Exception:
        return jnp.float32
    if "v5 lite" in kind or "v5lite" in kind or "v5e" in kind:
        return jnp.bfloat16
    return jnp.float32


# ----------------------------------------------------------------------------
# Pass 1 (tiny): centered sum-of-squares of the layer-0 conv output over time.
# The mean is computed in the wrapper via the factorization (sum_t patches) @ w0.
# ----------------------------------------------------------------------------
def _l0_sumsq_kernel(p_ref, w0_ref, mean_ref, ssq_ref, acc_ref, *, t1, tile):
    i = pl.program_id(1)

    @pl.when(i == 0)
    def _init():
        acc_ref[...] = jnp.zeros_like(acc_ref)

    p = p_ref[0]                                              # [tile, K0pad] f32
    h = jnp.dot(p, w0_ref[...], preferred_element_type=jnp.float32)   # MXU conv
    hc = h - mean_ref[0]                                      # centered (two-pass var)
    row = i * tile + jax.lax.broadcasted_iota(jnp.int32, (tile, 1), 0)
    hc = jnp.where(row < t1, hc, 0.0)                         # mask padded rows
    acc_ref[...] += jnp.sum(hc * hc, axis=0, keepdims=True)

    @pl.when(i == pl.num_programs(1) - 1)
    def _finalize():
        ssq_ref[0] = acc_ref[...]


def _layer0_sumsq(patches_tm, w0_mat, mean3, t1, tile, n_tiles):
    B, _, k0p = patches_tm.shape
    c0 = w0_mat.shape[1]
    kernel = functools.partial(_l0_sumsq_kernel, t1=t1, tile=tile)
    return pl.pallas_call(
        kernel,
        out_shape=jax.ShapeDtypeStruct((B, 1, c0), jnp.float32),
        grid=(B, n_tiles),
        in_specs=[
            pl.BlockSpec((1, tile, k0p), lambda b, i: (b, i, 0)),
            pl.BlockSpec((k0p, c0), lambda b, i: (0, 0)),
            pl.BlockSpec((1, 1, c0), lambda b, i: (b, 0, 0)),
        ],
        out_specs=pl.BlockSpec((1, 1, c0), lambda b, i: (b, 0, 0)),
        scratch_shapes=[pltpu.VMEM((1, c0), jnp.float32)],
        compiler_params=pltpu.CompilerParams(
            dimension_semantics=("parallel", "arbitrary"),
            vmem_limit_bytes=32 * 1024 * 1024,
        ),
    )(patches_tm, w0_mat, mean3)


# ----------------------------------------------------------------------------
# Pass 2 (fused): layer-0 conv (MXU) + GN affine + GELU -> [conv + GELU] x (L-1),
# activations resident in VMEM in the cumulatively de-interleaved layout.
# ----------------------------------------------------------------------------
def _fused_stack_kernel(p_hbm, w0_ref, scale_ref, shift_ref, *rest,
                        k0p, d0, c0, stage_cfg, t_f, out_ncl):
    n_stages = len(stage_cfg)
    w_refs = rest[:n_stages]
    o_ref = rest[n_stages]
    pbuf = rest[n_stages + 1]
    dma_sem = rest[n_stages + 2]
    bufs = rest[n_stages + 3:]

    b = pl.program_id(0)
    jt = pl.program_id(1)
    rows_p = pbuf.shape[0]

    # Overlapping (haloed) window of layer-0 patch rows for this output tile, fetched
    # straight from HBM (replaces the wrapper-side jnp.take window materialization).
    row0 = pl.multiple_of(jt * t_f, 8)
    cp = pltpu.make_async_copy(p_hbm.at[b, pl.ds(row0, rows_p)], pbuf, dma_sem)
    cp.start()
    cp.wait()

    # ---- stage 0: layer-0 conv on the MXU, folded GroupNorm affine, exact GELU.
    # Output is written phase-by-phase into the de-interleaved layout [rows, d0*C0]
    # (row r, lane block ph <-> layer-0 time r*d0 + ph).
    scale = scale_ref[0]
    shift = shift_ref[0]
    for ph in range(d0):
        p = pbuf[:, ph * k0p:(ph + 1) * k0p]
        h = jnp.dot(p, w0_ref[...], preferred_element_type=jnp.float32)
        h = h * scale + shift
        g = jax.nn.gelu(h, approximate=False)
        bufs[0][:, ph * c0:(ph + 1) * c0] = g.astype(bufs[0].dtype)

    # ---- stages 1..L-1: Conv1d as fused-tap MXU GEMMs on contiguous lane slices,
    # static row offsets in {0, 1}; no strided loads, no relayouts.
    for j, (ksz, stride, c_in, c_out, d_o, d_in, out_rows) in enumerate(stage_cfg):
        in_buf = bufs[j]
        w_ref = w_refs[j]
        last = j == n_stages - 1
        for ph in range(d_o):
            acc = None
            k = 0
            while k < ksz:
                pos = ph * stride + k
                q, lane0 = pos // d_in, pos % d_in
                n = min(ksz - k, d_in - lane0)        # taps fused into one GEMM
                a = in_buf[q:q + out_rows, lane0 * c_in:(lane0 + n) * c_in]
                w = w_ref[k * c_in:(k + n) * c_in, :]
                d = jnp.dot(a, w, preferred_element_type=jnp.float32)
                acc = d if acc is None else acc + d
                k += n
            g = jax.nn.gelu(acc, approximate=False)
            if last:
                if out_ncl:
                    o_ref[0] = g.T.astype(o_ref.dtype)   # store NCL directly (no XLA transpose)
                else:
                    o_ref[0] = g.astype(o_ref.dtype)     # lane-dense [t_f, C_last]
            else:
                bufs[j + 1][:, ph * c_out:(ph + 1) * c_out] = g.astype(bufs[j + 1].dtype)


def _run_fused(patches_di, w0_mat, scale, shift, w_cats, stage_cfg, buf_shapes, *,
               d0, k0p, c0, rows_p, t_f, n_t, c_last, out_ncl, compute_dtype, vmem_cap):
    B = patches_di.shape[0]
    n_stages = len(stage_cfg)

    in_specs = [
        pl.BlockSpec(memory_space=pl.ANY),                    # patches (manual DMA window)
        pl.BlockSpec((k0p, c0), lambda b, j: (0, 0)),
        pl.BlockSpec((1, 1, c0), lambda b, j: (b, 0, 0)),
        pl.BlockSpec((1, 1, c0), lambda b, j: (b, 0, 0)),
    ]
    for w in w_cats:
        in_specs.append(pl.BlockSpec(w.shape, lambda b, j: (0, 0)))

    if out_ncl:
        out_shape = jax.ShapeDtypeStruct((B, c_last, n_t * t_f), jnp.float32)
        out_spec = pl.BlockSpec((1, c_last, t_f), lambda b, j: (b, 0, j))
    else:
        out_shape = jax.ShapeDtypeStruct((B, n_t * t_f, c_last), jnp.float32)
        out_spec = pl.BlockSpec((1, t_f, c_last), lambda b, j: (b, j, 0))

    scratch = [pltpu.VMEM((rows_p, d0 * k0p), jnp.float32), pltpu.SemaphoreType.DMA]
    scratch += [pltpu.VMEM(s, compute_dtype) for s in buf_shapes]

    itemsize = jnp.dtype(compute_dtype).itemsize
    weight_bytes = sum(int(w.size) * w.dtype.itemsize for w in w_cats)
    est = (rows_p * d0 * k0p * 4
           + sum(r * l for (r, l) in buf_shapes) * itemsize
           + 2 * weight_bytes                          # double-buffered weight blocks
           + 2 * (k0p * c0 + 2 * c0) * 4               # w0 + scale/shift blocks
           + 2 * t_f * c_last * 4                      # double-buffered output block
           + (2 << 20))
    # Never clamp the scoped limit below the footprint estimate (review); tile selection
    # keeps `est` well under physical VMEM on every generation (v7x 64 MiB, v5e/v6e 128).
    del vmem_cap
    vmem_limit = min(max(int(est * 1.25), 32 * 1024 * 1024), 128 * 1024 * 1024)

    kernel = functools.partial(_fused_stack_kernel, k0p=k0p, d0=d0, c0=c0,
                               stage_cfg=tuple(stage_cfg), t_f=t_f, out_ncl=out_ncl)
    return pl.pallas_call(
        kernel,
        out_shape=out_shape,
        grid=(B, n_t),
        in_specs=in_specs,
        out_specs=out_spec,
        scratch_shapes=scratch,
        compiler_params=pltpu.CompilerParams(
            dimension_semantics=("parallel", "parallel"),
            vmem_limit_bytes=int(vmem_limit),
        ),
    )(patches_di, w0_mat, scale, shift, *w_cats)


# ----------------------------------------------------------------------------
# Wrapper reproducing MyWav2Vec2FeatureEncoder.forward
# ----------------------------------------------------------------------------
def wav2vec2_feature_encoder(input_values, params, *, tile_t_out=None, tile_t_l0=None,
                             compute_dtype=None, output_layout="NCL"):
    """input_values: [B, T] raw waveform -> [B, C_last, T_last] (PyTorch NCL layout)."""
    layers = params["conv_layers"]
    assert len(layers) >= 2, "expected the full wav2vec2 conv stack"
    l0 = layers[0]
    w0 = l0["conv_weight"]                                # [C0, 1, K0]
    c0, c_in0, k0 = w0.shape
    assert c_in0 == 1, "wav2vec2 layer 0 consumes the raw 1-channel waveform"
    s0 = int(l0["stride"])
    assert l0["gn_weight"] is not None, "layer 0 carries the GroupNorm"
    rest = layers[1:]
    for l in rest:
        assert l.get("gn_weight") is None
    n_rest = len(rest)
    # TODO(synk): only the HF 'group' feat_extract_norm variant (GroupNorm on layer 0
    # only, conv_bias=False) is fused here; the per-layer LayerNorm variant would need
    # per-layer statistics passes.
    if compute_dtype is None:
        compute_dtype = _default_compute_dtype()
    compute_dtype = jnp.dtype(compute_dtype)

    gamma = jnp.reshape(l0["gn_weight"], (-1,)).astype(jnp.float32)
    beta = jnp.reshape(l0["gn_bias"], (-1,)).astype(jnp.float32)

    B, T = input_values.shape
    t1 = (T - k0) // s0 + 1                               # real layer-0 output length
    assert t1 >= 1, "input too short for the first conv"

    # ---- stack geometry -------------------------------------------------------
    strides_r = [int(l["stride"]) for l in rest]
    kernels_r = [int(l["conv_weight"].shape[2]) for l in rest]
    chans_r = [int(l["conv_weight"].shape[0]) for l in rest]
    cins_r = [int(l["conv_weight"].shape[1]) for l in rest]
    assert cins_r[0] == c0
    for j in range(1, n_rest):
        assert cins_r[j] == chans_r[j - 1]
    # dfac[j]: de-interleave factor of stage-j output (product of downstream strides).
    dfac = [1] * (n_rest + 1)
    for j in range(n_rest - 1, -1, -1):
        dfac[j] = dfac[j + 1] * strides_r[j]
    S = dfac[0]
    t_final = t1
    for k_, s_ in zip(kernels_r, strides_r):
        t_final = (t_final - k_) // s_ + 1
    c_last = chans_r[-1]
    assert t_final >= 1, "input too short for the conv stack"

    # ---- tile selection (VMEM-capacity aware; larger tiles on 128 MiB parts) ---
    itemsize = jnp.dtype(compute_dtype).itemsize
    k0p = _round_up(k0, 8)
    cap = _vmem_capacity_bytes()
    per_row = S * k0p * 4 + 2 * c_last * 4                # patch window + output block
    for j in range(n_rest):
        per_row += dfac[j] * (c0 if j == 0 else chans_r[j - 1]) * itemsize
    weight_bytes = sum(kernels_r[j] * cins_r[j] * chans_r[j] * itemsize
                       for j in range(n_rest))
    fixed = 2 * weight_bytes + 2 * (k0p * c0 + 2 * c0) * 4 + (1 << 20)
    if tile_t_out is None:
        usable = max(int(0.65 * cap) - fixed, 2 << 20)
        tile_t_out = max(8, min(1024, (usable // per_row // 8) * 8))
    tile_t_out = min(tile_t_out, _round_up(t_final, 8))
    tile_t_out = max(8, (tile_t_out // 8) * 8)
    if B == 1:
        # v7x has two TensorCores per chip: make sure the 'parallel' time axis has
        # several tiles so both get work even at B=1 (harmless on 1-TC parts).
        want = min(4, max(1, _cdiv(t_final, 8)))
        if want > 1:
            tile_t_out = min(tile_t_out, max(8, _round_up(_cdiv(t_final, want), 8)))
    t_f = tile_t_out
    n_t = _cdiv(t_final, t_f)

    # ---- per-tile buffer geometry (rows of the de-interleaved activations) -----
    t_len = [0] * (n_rest + 1)
    t_len[n_rest] = t_f
    for j in range(n_rest, 0, -1):
        t_len[j - 1] = (t_len[j] - 1) * strides_r[j - 1] + kernels_r[j - 1]
    alloc = [0] * (n_rest + 1)
    alloc[n_rest] = t_f
    for j in range(n_rest, 0, -1):
        d_in, d_o = dfac[j - 1], dfac[j]
        q_max = ((d_o - 1) * strides_r[j - 1] + kernels_r[j - 1] - 1) // d_in
        need = max(alloc[j] + q_max, _cdiv(t_len[j - 1], d_in))
        alloc[j - 1] = _round_up(need, 8)
    rows_p = alloc[0]
    R_total = (n_t - 1) * t_f + rows_p
    T1B = R_total * S

    # ---- layer-0 im2col on the tiny 1-channel input (the only wrapper-side im2col) ---
    x_len = (T1B - 1) * s0 + k0
    x_pad = jnp.pad(input_values.astype(jnp.float32), ((0, 0), (0, max(0, x_len - T))))
    cols = [x_pad[:, k: k + s0 * (T1B - 1) + 1: s0] for k in range(k0)]
    patches_tm = jnp.stack(cols, axis=-1)                 # [B, T1B, K0]
    if k0p > k0:
        patches_tm = jnp.pad(patches_tm, ((0, 0), (0, 0), (0, k0p - k0)))
    # Free (row-major) view of the same data, de-interleaved by S for the fused pass.
    patches_di = patches_tm.reshape(B, R_total, S * k0p)
    w0_mat = jnp.zeros((k0p, c0), jnp.float32).at[:k0].set(
        w0[:, 0, :].T.astype(jnp.float32))                # [K0pad, C0]

    # ---- GroupNorm statistics: factorized mean (XLA) + centered sumsq (Pallas) -----
    p_sum = jnp.sum(patches_tm[:, :t1, :], axis=1)        # [B, K0pad]
    mean = (p_sum @ w0_mat) / float(t1)                   # [B, C0]   (sum_t h = (sum_t p) @ w0)
    mean3 = mean[:, None, :]
    if tile_t_l0 is None:
        tile_t_l0 = 1024
    tile_t_l0 = max(8, min((int(tile_t_l0) // 8) * 8, _round_up(t1, 8)))
    tile_t_l0 = min(tile_t_l0, T1B)
    n_l0 = _cdiv(t1, tile_t_l0)
    ssq = _layer0_sumsq(patches_tm, w0_mat, mean3, t1, tile_t_l0, n_l0)
    var = ssq[:, 0, :] / float(t1)                        # biased, like torch GroupNorm
    rstd = jax.lax.rsqrt(var + _EPS)
    scale = (gamma[None, :] * rstd)[:, None, :]                           # [B, 1, C0]
    shift = (beta[None, :] - mean * gamma[None, :] * rstd)[:, None, :]    # [B, 1, C0]

    # ---- fused-stack weights: taps concatenated along the contraction dim ----------
    w_cats, stage_cfg = [], []
    for j in range(n_rest):
        w = rest[j]["conv_weight"]                        # [C_out, C_in, K]
        w_cat = jnp.transpose(w, (2, 1, 0)).reshape(
            kernels_r[j] * cins_r[j], chans_r[j]).astype(compute_dtype)
        w_cats.append(w_cat)
        stage_cfg.append((kernels_r[j], strides_r[j], cins_r[j], chans_r[j],
                          dfac[j + 1], dfac[j], alloc[j + 1]))
    assert stage_cfg[-1][4] == 1 and stage_cfg[-1][6] == t_f
    buf_shapes = [(alloc[0], S * c0)]
    for j in range(1, n_rest):
        buf_shapes.append((alloc[j], dfac[j] * chans_r[j - 1]))

    # ---- pass 2: fully fused conv stack ---------------------------------------------
    out_ncl_inkernel = (output_layout == "NCL") and (t_f % 128 == 0 or n_t == 1)
    y = _run_fused(patches_di, w0_mat, scale, shift, w_cats, stage_cfg, buf_shapes,
                   d0=S, k0p=k0p, c0=c0, rows_p=rows_p, t_f=t_f, n_t=n_t,
                   c_last=c_last, out_ncl=out_ncl_inkernel,
                   compute_dtype=compute_dtype, vmem_cap=cap)
    if output_layout == "NLC":
        return y[:, :t_final, :]
    if out_ncl_inkernel:
        return y[:, :, :t_final]
    return jnp.transpose(y[:, :t_final, :], (0, 2, 1))    # fallback: one XLA transpose


# ----------------------------------------------------------------------------
# Pure-JAX reference (independent of the kernels) for the correctness check
# ----------------------------------------------------------------------------
def _reference(input_values, params):
    h = input_values[:, None, :]
    for layer in params["conv_layers"]:
        w = layer["conv_weight"]
        s = int(layer["stride"])
        h = jax.lax.conv_general_dilated(
            h, w, window_strides=(s,), padding="VALID",
            dimension_numbers=("NCH", "OIH", "NCH"))
        if layer["gn_weight"] is not None:
            mean = jnp.mean(h, axis=2, keepdims=True)
            var = jnp.mean((h - mean) ** 2, axis=2, keepdims=True)
            h = (h - mean) / jnp.sqrt(var + _EPS)
            h = h * layer["gn_weight"].reshape(1, -1, 1) + layer["gn_bias"].reshape(1, -1, 1)
        h = jax.nn.gelu(h, approximate=False)
    return h


if __name__ == "__main__":
    # Small wav2vec2-style synthetic config (deterministic params, no checkpoints).
    B, T = 2, 800
    conv_dim = (32, 64, 128)
    conv_kernel = (10, 3, 3)
    conv_stride = (5, 2, 2)

    key = jax.random.PRNGKey(0)
    keys = jax.random.split(key, len(conv_dim) + 1)
    x = jax.random.normal(keys[0], (B, T), dtype=jnp.float32)

    layers = []
    c_in = 1
    for i, (c_out, k, s) in enumerate(zip(conv_dim, conv_kernel, conv_stride)):
        w = jax.random.normal(keys[i + 1], (c_out, c_in, k), dtype=jnp.float32)
        w = w * (1.0 / (c_in * k)) ** 0.5
        if i == 0:  # first layer: GroupNorm(groups=c_out, channels=c_out)
            gn_w = 1.0 + 0.1 * jnp.arange(c_out, dtype=jnp.float32) / c_out
            gn_b = 0.05 * jnp.arange(c_out, dtype=jnp.float32) / c_out
        else:
            gn_w, gn_b = None, None
        layers.append(dict(conv_weight=w, stride=s, gn_weight=gn_w, gn_bias=gn_b))
        c_in = c_out
    params = {"conv_layers": layers}

    ref = _reference(x, params)

    # Run 1: f32, small explicit tiles -> multi-tile halo + XLA-transpose output path.
    out = wav2vec2_feature_encoder(x, params, tile_t_out=16, tile_t_l0=64,
                                   compute_dtype=jnp.float32)
    out = jax.block_until_ready(out)
    assert out.shape == ref.shape, (out.shape, ref.shape)
    err = float(jnp.max(jnp.abs(out - ref)))
    assert jnp.allclose(out, ref, atol=2e-4, rtol=2e-4), err

    # Run 2: bf16 MXU operands + bf16 VMEM-resident activations, auto tiles
    # (single time tile here -> exercises the in-kernel NCL-transpose store path).
    out_bf16 = wav2vec2_feature_encoder(x, params, compute_dtype=jnp.bfloat16)
    out_bf16 = jax.block_until_ready(out_bf16)
    assert out_bf16.shape == ref.shape
    assert bool(jnp.all(jnp.isfinite(out_bf16)))
    err_bf16 = float(jnp.max(jnp.abs(out_bf16 - ref)))
    assert jnp.allclose(out_bf16, ref, atol=1.5e-1, rtol=1.5e-1), err_bf16

    # Run 3: B=1, auto dtype / tiles -> exercises the "split time into >=2 tiles when
    # B is small" path (keeps both v7x TensorCores busy).
    out1 = wav2vec2_feature_encoder(x[:1], params)
    out1 = jax.block_until_ready(out1)
    assert out1.shape == ref[:1].shape
    err1 = float(jnp.max(jnp.abs(out1 - ref[:1])))
    assert jnp.allclose(out1, ref[:1], atol=1.5e-1, rtol=1.5e-1), err1

    print("KERNEL_OK")
</pallas_src>

<mosaic_0001>
module attributes {stable_mosaic.version = 11 : i64} {
  func.func @_l0_sumsq_kernel(%arg0: i32, %arg1: i32, %arg2: memref<1x64x16xf32, #tpu.memory_space<vmem>>, %arg3: memref<16x32xf32, #tpu.memory_space<vmem>>, %arg4: memref<1x1x32xf32, #tpu.memory_space<vmem>>, %arg5: memref<1x1x32xf32, #tpu.memory_space<vmem>>, %arg6: memref<1x32xf32, #tpu.memory_space<vmem>>) attributes {dimension_semantics = [#tpu.dimension_semantics<parallel>, #tpu.dimension_semantics<arbitrary>], iteration_bounds = array<i64: 2, 3>, scalar_prefetch = 0 : i64, scratch_operands = 1 : i64, tpu.core_type = #tpu.core_type<tc>, window_params = [{transform_indices = @transform_0, window_bounds = array<i64: 1, 64, 16>}, {pipeline_mode = #tpu.pipeline_mode<synchronous>, transform_indices = @transform_1, window_bounds = array<i64: 16, 32>}, {transform_indices = @transform_2, window_bounds = array<i64: 1, 1, 32>}, {transform_indices = @transform_3, window_bounds = array<i64: 1, 1, 32>}]} {
    %c0_i32 = arith.constant 0 : i32
    %0 = arith.cmpi eq, %arg1, %c0_i32 : i32
    %1 = arith.extui %0 : i1 to i32
    %c0_i32_0 = arith.constant 0 : i32
    %2 = arith.cmpi ne, %1, %c0_i32_0 : i32
    scf.if %2 {
      %cst_15 = arith.constant 0.000000e+00 : f32
      %30 = vector.broadcast %cst_15 : f32 to vector<1x32xf32>
      %c0_16 = arith.constant 0 : index
      %c0_17 = arith.constant 0 : index
      %31 = vector.load %arg6[%c0_16, %c0_17] : memref<1x32xf32, #tpu.memory_space<vmem>>, vector<1x32xf32>
      tpu.vector_store %arg6[%c0_16, %c0_17], %30 {strides = array<i32>} : memref<1x32xf32, #tpu.memory_space<vmem>>, vector<1x32xf32>,
    } else {
    }
    %c0 = arith.constant 0 : index
    %c0_1 = arith.constant 0 : index
    %c0_2 = arith.constant 0 : index
    %3 = vector.load %arg2[%c0, %c0_1, %c0_2] : memref<1x64x16xf32, #tpu.memory_space<vmem>>, vector<1x64x16xf32>
    %4 = vector.shape_cast %3 : vector<1x64x16xf32> to vector<64x16xf32>
    %c0_3 = arith.constant 0 : index
    %c0_4 = arith.constant 0 : index
    %5 = vector.load %arg3[%c0_3, %c0_4] : memref<16x32xf32, #tpu.memory_space<vmem>>, vector<16x32xf32>
    %cst = arith.constant dense<0.000000e+00> : vector<64x32xf32>
    %6 = tpu.matmul %4, %5, %cst {dimension_numbers = #tpu.dot_dimension_numbers<[1], [0], [0], [1], [0, 0, 1, 1], [], []>} : vector<64x16xf32>, vector<16x32xf32>, vector<64x32xf32> -> vector<64x32xf32>
    %c0_5 = arith.constant 0 : index
    %c0_6 = arith.constant 0 : index
    %c0_7 = arith.constant 0 : index
    %7 = vector.load %arg4[%c0_5, %c0_6, %c0_7] : memref<1x1x32xf32, #tpu.memory_space<vmem>>, vector<1x1x32xf32>
    %8 = vector.shape_cast %7 : vector<1x1x32xf32> to vector<1x32xf32>
    %9 = vector.broadcast %8 : vector<1x32xf32> to vector<64x32xf32>
    %10 = arith.subf %6, %9 : vector<64x32xf32>
    %c64_i32 = arith.constant 64 : i32
    %11 = arith.muli %arg1, %c64_i32 : i32
    %12 = tpu.iota {dimensions = array<i32: 0>} : vector<64x1xi32>
    %13 = vector.broadcast %11 : i32 to vector<64x1xi32>
    %14 = arith.addi %13, %12 : vector<64x1xi32>
    %c159_i32 = arith.constant 159 : i32
    %15 = vector.broadcast %c159_i32 : i32 to vector<64x1xi32>
    %16 = arith.cmpi slt, %14, %15 : vector<64x1xi32>
    %cst_8 = arith.constant 0.000000e+00 : f32
    %17 = vector.shape_cast %16 : vector<64x1xi1> to vector<64x1xi1>
    %18 = vector.broadcast %17 : vector<64x1xi1> to vector<64x32xi1>
    %19 = vector.broadcast %cst_8 : f32 to vector<64x32xf32>
    %20 = arith.select %18, %10, %19 : vector<64x32xi1>, vector<64x32xf32>
    %c0_9 = arith.constant 0 : index
    %c0_10 = arith.constant 0 : index
    %21 = vector.load %arg6[%c0_9, %c0_10] : memref<1x32xf32, #tpu.memory_space<vmem>>, vector<1x32xf32>
    %22 = arith.mulf %20, %20 : vector<64x32xf32>
    %cst_11 = arith.constant dense<0.000000e+00> : vector<32xf32>
    %23 = vector.multi_reduction <add>, %22, %cst_11 [0] : vector<64x32xf32> to vector<32xf32>
    %24 = vector.shape_cast %23 : vector<32xf32> to vector<1x32xf32>
    %25 = arith.addf %21, %24 : vector<1x32xf32>
    %c0_12 = arith.constant 0 : index
    %c0_13 = arith.constant 0 : index
    %26 = vector.load %arg6[%c0_12, %c0_13] : memref<1x32xf32, #tpu.memory_space<vmem>>, vector<1x32xf32>
    tpu.vector_store %arg6[%c0_12, %c0_13], %25 {strides = array<i32>} : memref<1x32xf32, #tpu.memory_space<vmem>>, vector<1x32xf32>,
    %c2_i32 = arith.constant 2 : i32
    %27 = arith.cmpi eq, %arg1, %c2_i32 : i32
    %28 = arith.extui %27 : i1 to i32
    %c0_i32_14 = arith.constant 0 : i32
    %29 = arith.cmpi ne, %28, %c0_i32_14 : i32
    scf.if %29 {
      %c0_15 = arith.constant 0 : index
      %c0_16 = arith.constant 0 : index
      %30 = vector.load %arg6[%c0_15, %c0_16] : memref<1x32xf32, #tpu.memory_space<vmem>>, vector<1x32xf32>
      %c0_17 = arith.constant 0 : index
      %c0_18 = arith.constant 0 : index
      %c0_19 = arith.constant 0 : index
      %31 = vector.load %arg5[%c0_17, %c0_18, %c0_19] : memref<1x1x32xf32, #tpu.memory_space<vmem>>, vector<1x1x32xf32>
      %32 = vector.shape_cast %31 : vector<1x1x32xf32> to vector<1x32xf32>
      %33 = vector.shape_cast %30 : vector<1x32xf32> to vector<1x1x32xf32>
      tpu.vector_store %arg5[%c0_17, %c0_18, %c0_19], %33 {strides = array<i32>} : memref<1x1x32xf32, #tpu.memory_space<vmem>>, vector<1x1x32xf32>,
    } else {
    }
    return
  }
  func.func @transform_0(%arg0: i32, %arg1: i32) -> (i32, i32, i32) {
    %c0_i32 = arith.constant 0 : i32
    %c0_i32_0 = arith.constant 0 : i32
    return %arg0, %arg1, %c0_i32 : i32, i32, i32
  }
  func.func @transform_1(%arg0: i32, %arg1: i32) -> (i32, i32) {
    %c0_i32 = arith.constant 0 : i32
    %c0_i32_0 = arith.constant 0 : i32
    %c0_i32_1 = arith.constant 0 : i32
    return %c0_i32, %c0_i32_0 : i32, i32
  }
  func.func @transform_2(%arg0: i32, %arg1: i32) -> (i32, i32, i32) {
    %c0_i32 = arith.constant 0 : i32
    %c0_i32_0 = arith.constant 0 : i32
    %c0_i32_1 = arith.constant 0 : i32
    return %arg0, %c0_i32, %c0_i32_0 : i32, i32, i32
  }
  func.func @transform_3(%arg0: i32, %arg1: i32) -> (i32, i32, i32) {
    %c0_i32 = arith.constant 0 : i32
    %c0_i32_0 = arith.constant 0 : i32
    %c0_i32_1 = arith.constant 0 : i32
    return %arg0, %c0_i32, %c0_i32_0 : i32, i32, i32
  }
}

</mosaic_0001>

<llo_original>
// kernel: tpu_custom_call.1
$region0: #{tpu_custom_call.1}
  #allocation0 [shape = 'u32[]', space=smem, size = 0x4, offset = 0x4, fixed_abs, tag = 'smem constant byte address 0x4 - core index']
  #allocation1 [shape = 'u32[72,128]{1,0:T(1,128)}', space=vmem, size = 0x9000, scoped, tag = 'internal scratch']
  #allocation2 [shape = 'f32[1,32]{1,0:T(1,128)}', space=vmem, size = 0x200, scoped, tag = 'scratch operand']
  %s0 = inlined_call_operand.vmem [shape: f32[2,256,16], index: 0, kind: input, shape index: {}]
  %s1 = inlined_call_operand.vmem [shape: f32[16,32], index: 1, kind: input, shape index: {}]
  %s2 = inlined_call_operand.vmem [shape: f32[2,1,32], index: 2, kind: input, shape index: {}]
  %s3 = inlined_call_operand.hbm [shape: f32[2,1,32], index: 3, kind: output, shape index: {}]
  %s4 = sld [smem:[#allocation0]]
  $region53: #{tpu_custom_call.1} parent=0
    _
  %s6 = ssub.s32 1, %s4
  %s7 = scalar_select 0, %s6, %s4
  $region1: #{tpu_custom_call.1} parent=0
    #allocation3 [shape = 'u8[1024]{0}', space=vmem, size = 0x400, scoped, tag = 'output window, operand 0']
    #allocation4 [shape = 's32[2]{0}', space=sflag, size = 0x8, scoped, tag = 'scoped memory for tpu_custom_call.1']
    %8 = vsyncpa [#allocation4], 0
    %s9 = scalar_lea.sflag [#allocation4], 1
    %10 = vsyncpa %s9, 0
    loop: start=0, step=1, limit=8
    $region2: #{tpu_custom_call.1} parent=1 // loop_pre_header
      _
    $region3: #{tpu_custom_call.1} parent=1 // loop_header
      %s12 = sphi 0, %s16
      %p13 = scmp.ge.s32.totalorder %s12, 8
      %s19 = sphi 0, %s31
      %s20 = sphi 0, %s27
      %s21 = sphi 0, %s19
      %s22 = sphi 0, %s20
      %s23 = sphi 0, %s21
      %s24 = sphi 0, %s22
      %s36 = sphi 0, %s38
      %s39 = sphi 0, %s36
      %s40 = sphi 0, %s39
      %s56 = sphi 0, %s40
      %s60 = sphi 0, %s60
      %s62 = sphi 0, %s60
      %s63 = sphi 0, %s62
      %s77 = sphi 0, %s63
      %s83 = sphi 0, %s85
      %s86 = sphi 0, %s83
      %s87 = sphi 0, %s86
      %s103 = sphi 0, %s87
      %s109 = sphi 0, %s111
      %s112 = sphi 0, %s109
      %s113 = sphi 0, %s112
      %s129 = sphi 0, %s113
    $region4: #{tpu_custom_call.1} parent=1 // loop_header_branch
      %15 = sbr.rel (%p13) target = $region8
    $region5: #{tpu_custom_call.1} parent=1 // loop_body
      %s17 = ssub.s32 %s12, 1
      %s18 = ssub.s32 %s12, 2
      %s25 = sadd.s32 1, %s20
      %p26 = scmp.ge.s32.totalorder %s25, 3
      %s27 = scalar_select %p26, 0, %s25
      %s28 = sadd.s32 1, %s19
      %s29 = scalar_select %p26, %s28, %s19
      %p30 = scmp.ge.s32.totalorder %s29, 2
      %s31 = scalar_select %p30, 0, %s29
      %s32 = ssub.s32 %s19, %s31
      %s33 = ssub.s32 %s20, %s27
      %s34 = sor.u32 %s32, %s33
      %p35 = scmp.eq.s32.totalorder %s34, 0
      %s37 = sadd.s32 %s36, 1
      %s38 = scalar_select %p35, %s36, %s37
      %p41 = pneg %p35
      %p42 = scmp.eq.s32.totalorder %s12, 5
      %p43 = por %p41, %p42
      %p44 = scmp.ne.s32.totalorder %s36, %s39
      %p45 = scmp.eq.s32.totalorder %s12, 0
      %p46 = por %p44, %p45
      %p47 = scmp.ne.s32.totalorder %s36, %s39
      %p48 = scmp.eq.s32.totalorder %s17, 5
      %p49 = por %p47, %p48
      %p50 = scmp.ne.s32.totalorder %s39, %s40
      %p51 = scmp.eq.s32.totalorder %s17, 0
      %p52 = por %p50, %p51
      %p53 = scmp.ne.s32.totalorder %s39, %s40
      %p54 = scmp.eq.s32.totalorder %s18, 5
      %p55 = por %p53, %p54
      %p57 = scmp.ne.s32.totalorder %s40, %s56
      %p58 = scmp.eq.s32.totalorder %s18, 0
      %p59 = por %p57, %p58
      %s61 = sadd.s32 %s60, 1
      %p64 = scmp.eq.s32.totalorder %s12, 5
      %p65 = scmp.ne.s32.totalorder %s60, %s62
      %p66 = scmp.eq.s32.totalorder %s12, 0
      %p67 = por %p65, %p66
      %p68 = scmp.ne.s32.totalorder %s60, %s62
      %p69 = scmp.eq.s32.totalorder %s17, 5
      %p70 = por %p68, %p69
      %p71 = scmp.ne.s32.totalorder %s62, %s63
      %p72 = scmp.eq.s32.totalorder %s17, 0
      %p73 = por %p71, %p72
      %p74 = scmp.ne.s32.totalorder %s62, %s63
      %p75 = scmp.eq.s32.totalorder %s18, 5
      %p76 = por %p74, %p75
      %p78 = scmp.ne.s32.totalorder %s63, %s77
      %p79 = scmp.eq.s32.totalorder %s18, 0
      %p80 = por %p78, %p79
      %s81 = ssub.s32 %s19, %s31
      %p82 = scmp.eq.s32.totalorder %s81, 0
      %s84 = sadd.s32 %s83, 1
      %s85 = scalar_select %p82, %s83, %s84
      %p88 = pneg %p82
      %p89 = scmp.eq.s32.totalorder %s12, 5
      %p90 = por %p88, %p89
      %p91 = scmp.ne.s32.totalorder %s83, %s86
      %p92 = scmp.eq.s32.totalorder %s12, 0
      %p93 = por %p91, %p92
      %p94 = scmp.ne.s32.totalorder %s83, %s86
      %p95 = scmp.eq.s32.totalorder %s17, 5
      %p96 = por %p94, %p95
      %p97 = scmp.ne.s32.totalorder %s86, %s87
      %p98 = scmp.eq.s32.totalorder %s17, 0
      %p99 = por %p97, %p98
      %p100 = scmp.ne.s32.totalorder %s86, %s87
      %p101 = scmp.eq.s32.totalorder %s18, 5
      %p102 = por %p100, %p101
      %p104 = scmp.ne.s32.totalorder %s87, %s103
      %p105 = scmp.eq.s32.totalorder %s18, 0
      %p106 = por %p104, %p105
      %s107 = ssub.s32 %s19, %s31
      %p108 = scmp.eq.s32.totalorder %s107, 0
      %s110 = sadd.s32 %s109, 1
      %s111 = scalar_select %p108, %s109, %s110
      %p114 = pneg %p108
      %p115 = scmp.eq.s32.totalorder %s12, 5
      %p116 = por %p114, %p115
      %p117 = scmp.ne.s32.totalorder %s109, %s112
      %p118 = scmp.eq.s32.totalorder %s12, 0
      %p119 = por %p117, %p118
      %p120 = scmp.ne.s32.totalorder %s109, %s112
      %p121 = scmp.eq.s32.totalorder %s17, 5
      %p122 = por %p120, %p121
      %p123 = scmp.ne.s32.totalorder %s112, %s113
      %p124 = scmp.eq.s32.totalorder %s17, 0
      %p125 = por %p123, %p124
      %p126 = scmp.ne.s32.totalorder %s112, %s113
      %p127 = scmp.eq.s32.totalorder %s18, 5
      %p128 = por %p126, %p127
      %p130 = scmp.ne.s32.totalorder %s113, %s129
      %p131 = scmp.eq.s32.totalorder %s18, 0
      %p132 = por %p130, %p131
      %p133 = scmp.le.s32.totalorder 1, %s12
      %p134 = scmp.lt.s32.totalorder %s12, 7
      %p135 = pnand %p133, %p134
      %p136 = pneg %p135
      // Predicated region
      $region9: #{tpu_custom_call.1} parent=5 // pred_check
        _
      $region10: #{tpu_custom_call.1} parent=5 // pred_check_branch
        %138 = sbr.rel (%p135) target = $region12
      $region11: #{tpu_custom_call.1} parent=5 // pred_region
        %s139 = ssub.s32 %s12, 1
        // Predicated region
        $region13: #{tpu_custom_call.1} parent=11 // pred_check
          %p140 = pneg %p73
        $region14: #{tpu_custom_call.1} parent=11 // pred_check_branch
          %142 = sbr.rel (%p140) target = $region16
        $region15: #{tpu_custom_call.1} parent=11 // pred_region
          _
        $region16: #{tpu_custom_call.1} parent=11 // pred_fallthru
          _
      $region12: #{tpu_custom_call.1} parent=5 // pred_fallthru
        _
      %p143 = scmp.lt.s32.totalorder %s12, 6
      // Predicated region
      $region17: #{tpu_custom_call.1} parent=5 // pred_check
        %p144 = pneg %p143
      $region18: #{tpu_custom_call.1} parent=5 // pred_check_branch
        %146 = sbr.rel (%p144) target = $region20
      $region19: #{tpu_custom_call.1} parent=5 // pred_region
        // Predicated region
        $region21: #{tpu_custom_call.1} parent=19 // pred_check
          %p147 = pneg %p46
        $region22: #{tpu_custom_call.1} parent=19 // pred_check_branch
          %149 = sbr.rel (%p147) target = $region24
        $region23: #{tpu_custom_call.1} parent=19 // pred_region
          %s150 = smul.u32 8, %s20
          %p151 = scmp.lt.s32.totalorder %s19, 1
          %s152 = scalar_select %p151, %s19, 1
          %p153 = scmp.lt.s32.totalorder %s150, 31
          %s154 = scalar_select %p153, %s150, 31
          %s155 = smul.addr %s152, 32
          %s156 = sadd.s32 %s154, %s155
          %s157 = smul.addr %s156, 8
          %s158 = scalar_lea.vmem %s0, %s157
          %s159 = smul.u32 8, %s20
        $region24: #{tpu_custom_call.1} parent=19 // pred_fallthru
          _
        // Predicated region
        $region25: #{tpu_custom_call.1} parent=19 // pred_check
          %p160 = pneg %p93
        $region26: #{tpu_custom_call.1} parent=19 // pred_check_branch
          %162 = sbr.rel (%p160) target = $region28
        $region27: #{tpu_custom_call.1} parent=19 // pred_region
          %p163 = scmp.lt.s32.totalorder %s19, 1
          %s164 = scalar_select %p163, %s19, 1
          %s165 = scalar_lea.vmem %s2, %s164
        $region28: #{tpu_custom_call.1} parent=19 // pred_fallthru
          _
      $region20: #{tpu_custom_call.1} parent=5 // pred_fallthru
        _
      %p166 = scmp.le.s32.totalorder 1, %s12
      %p167 = scmp.lt.s32.totalorder %s12, 7
      %p168 = pnand %p166, %p167
      %p169 = pneg %p168
      // Predicated region
      $region29: #{tpu_custom_call.1} parent=5 // pred_check
        _
      $region30: #{tpu_custom_call.1} parent=5 // pred_check_branch
        %171 = sbr.rel (%p168) target = $region32
      $region31: #{tpu_custom_call.1} parent=5 // pred_region
        %s172 = ssub.s32 %s12, 1
        %s173 = smul.u32 8, %s22
        %p174 = scmp.lt.s32.totalorder %s21, 1
        %s175 = scalar_select %p174, %s21, 1
        %p176 = scmp.lt.s32.totalorder %s173, 31
        %s177 = scalar_select %p176, %s173, 31
        %s178 = smul.addr %s175, 32
        %s179 = sadd.s32 %s177, %s178
        %s180 = smul.addr %s179, 8
        %s181 = scalar_lea.vmem %s0, %s180
        %p182 = pneg %p52
        %p183 = pneg %p49
        %p184 = pneg %p73
        %p185 = pneg %p70
        %p186 = scmp.lt.s32.totalorder %s21, 1
        %s187 = scalar_select %p186, %s21, 1
        %s188 = scalar_lea.vmem %s2, %s187
        %p189 = pneg %p99
        %p190 = pneg %p96
        %p191 = pneg %p125
        %p192 = pneg %p122
        %s193 = sand.u32 %s112, 1
        %s194 = scalar_lea.sflag [#allocation4], %s193
        %s195 = sand.u32 %s112, 1
        %s196 = scalar_lea.vmem [#allocation3], %s195
        %s197 = smul.u32 8, %s22
        %p198 = scmp.lt.s32.totalorder %s21, 1
        %s199 = scalar_select %p198, %s21, 1
        %p200 = scmp.lt.s32.totalorder %s197, 31
        %s201 = scalar_select %p200, %s197, 31
        %s202 = smul.addr %s199, 32
        %s203 = sadd.s32 %s201, %s202
        %s204 = smul.addr %s203, 8
        %s205 = scalar_lea.vmem %s0, %s204
        %s206 = smul.u32 8, %s22
        %p207 = scmp.lt.s32.totalorder %s21, 1
        %s208 = scalar_select %p207, %s21, 1
        %s209 = scalar_lea.vmem %s2, %s208
        %p210 = scmp.eq.s32.totalorder %s22, 0
        // Predicated region
        $region33: #{tpu_custom_call.1} parent=31 // pred_check
          %p211 = pneg %p210
        $region34: #{tpu_custom_call.1} parent=31 // pred_check_branch
          %213 = sbr.rel (%p211) target = $region36
        $region35: #{tpu_custom_call.1} parent=31 // pred_region
          %vm214 = vcmask 253952
          %215 = vst.msk [vmem:[#allocation2] sm:$0x1] %vm214, 0.0
        $region36: #{tpu_custom_call.1} parent=31 // pred_fallthru
          _
        %v216 = vld [vmem:[%s205] sm:$0xff]
        %v217 = vld [vmem:[%s205 + $0x8] sm:$0xff]
        %v218 = vld [vmem:[%s205 + $0x10] sm:$0xff]
        %v219 = vld [vmem:[%s205 + $0x18] sm:$0xff]
        %v220 = vld [vmem:[%s205 + $0x20] sm:$0xff]
        %v221 = vld [vmem:[%s205 + $0x28] sm:$0xff]
        %v222 = vld [vmem:[%s205 + $0x30] sm:$0xff]
        %v223 = vld [vmem:[%s205 + $0x38] sm:$0xff]
        %v224 = vld [vmem:[%s1] sm:$0xff]
        %v225 = vld [vmem:[%s1 + $0x8] sm:$0xff]
        %vm226 = vcmask 130048
        %v228 = vsel %vm226, %v216, 0
        %v231 = vsel %vm226, %v217, 0
        %v234 = vsel %vm226, %v218, 0
        %v237 = vsel %vm226, %v219, 0
        %v240 = vsel %vm226, %v220, 0
        %v243 = vsel %vm226, %v221, 0
        %v246 = vsel %vm226, %v222, 0
        %v249 = vsel %vm226, %v223, 0
        %251 = vmatpush.msra.mxu0 0.0
        %252 = vmatpush.msra.mxu0 0.0
        %253 = vmatpush.msra.mxu0 0.0
        %254 = vmatpush.msra.mxu0 0.0
        %255 = vmatpush.msra.mxu0 0.0
        %256 = vmatpush.msra.mxu0 0.0
        %257 = vmatpush.msra.mxu0 0.0
        %258 = vmatpush.msra.mxu0 0.0
        %259 = vmatpush.msra.mxu0 0.0
        %260 = vmatpush.msra.mxu0 0.0
        %261 = vmatpush.msra.mxu0 0.0
        %262 = vmatpush.msra.mxu0 0.0
        %263 = vmatpush.msra.mxu0 0.0
        %264 = vmatpush.msra.mxu0 0.0
        %265 = vmatpush.msra.mxu0 %v225
        %266 = vmatpush.msra.mxu0 %v224
        %267 = vmatmul.f32.gmra.mxu0 %v228
        %v268 = vpop.f32.mrf.mxu0
        %v269 = vadd.f32 0.0, %v268
        %270 = vmatmul.f32.gmra.mxu0 %v231
        %v271 = vpop.f32.mrf.mxu0
        %v272 = vadd.f32 0.0, %v271
        %273 = vmatmul.f32.gmra.mxu0 %v234
        %v274 = vpop.f32.mrf.mxu0
        %v275 = vadd.f32 0.0, %v274
        %276 = vmatmul.f32.gmra.mxu0 %v237
        %v277 = vpop.f32.mrf.mxu0
        %v278 = vadd.f32 0.0, %v277
        %279 = vmatmul.f32.gmra.mxu0 %v240
        %v280 = vpop.f32.mrf.mxu0
        %v281 = vadd.f32 0.0, %v280
        %282 = vmatmul.f32.gmra.mxu0 %v243
        %v283 = vpop.f32.mrf.mxu0
        %v284 = vadd.f32 0.0, %v283
        %285 = vmatmul.f32.gmra.mxu0 %v246
        %v286 = vpop.f32.mrf.mxu0
        %v287 = vadd.f32 0.0, %v286
        %288 = vmatmul.f32.gmra.mxu0 %v249
        %v289 = vpop.f32.mrf.mxu0
        %v290 = vadd.f32 0.0, %v289
        %291 = vdwg.mxu0
        %v292 = vld [vmem:[%s209] sm:$0x1]
        %v294 = vperm.slane %v292, 0
        %v296 = vsub.f32 %v269, %v294
        %v297 = vsub.f32 %v272, %v294
        %v298 = vsub.f32 %v275, %v294
        %v299 = vsub.f32 %v278, %v294
        %v300 = vsub.f32 %v281, %v294
        %v301 = vsub.f32 %v284, %v294
        %v302 = vsub.f32 %v287, %v294
        %v303 = vsub.f32 %v290, %v294
        %s304 = smul.u32 %s22, 64
        %v305 = vlaneseq
        %v306 = vshrl.u32 %v305, 7
        %v307 = vadd.s32 %v306, 8
        %v308 = vadd.s32 %v306, 16
        %v309 = vadd.s32 %v306, 24
        %v310 = vadd.s32 %v306, 32
        %v311 = vadd.s32 %v306, 40
        %v312 = vadd.s32 %v306, 48
        %v313 = vadd.s32 %v306, 56
        %v314 = vstv %s304
        %v315 = vadd.s32 %v314, %v306
        %v316 = vadd.s32 %v314, %v307
        %v317 = vadd.s32 %v314, %v308
        %v318 = vadd.s32 %v314, %v309
        %v319 = vadd.s32 %v314, %v310
        %v320 = vadd.s32 %v314, %v311
        %v321 = vadd.s32 %v314, %v312
        %v322 = vadd.s32 %v314, %v313
        %vm323 = vcmp.lt.s32.totalorder %v315, 159
        %vm324 = vcmp.lt.s32.totalorder %v316, 159
        %vm325 = vcmp.lt.s32.totalorder %v317, 159
        %vm326 = vcmp.lt.s32.totalorder %v318, 159
        %vm327 = vcmp.lt.s32.totalorder %v319, 159
        %vm328 = vcmp.lt.s32.totalorder %v320, 159
        %vm329 = vcmp.lt.s32.totalorder %v321, 159
        %vm330 = vcmp.lt.s32.totalorder %v322, 159
        %v331 = vsel %vm323, 1, 0
        %v332 = vsel %vm324, 1, 0
        %v333 = vsel %vm325, 1, 0
        %v334 = vsel %vm326, 1, 0
        %v335 = vsel %vm327, 1, 0
        %v336 = vsel %vm328, 1, 0
        %v337 = vsel %vm329, 1, 0
        %v338 = vsel %vm330, 1, 0
        %vm339 = vcmp.eq.s32.totalorder %v331, 1
        %vm340 = vcmp.eq.s32.totalorder %v332, 1
        %vm341 = vcmp.eq.s32.totalorder %v333, 1
        %vm342 = vcmp.eq.s32.totalorder %v334, 1
        %vm343 = vcmp.eq.s32.totalorder %v335, 1
        %vm344 = vcmp.eq.s32.totalorder %v336, 1
        %vm345 = vcmp.eq.s32.totalorder %v337, 1
        %vm346 = vcmp.eq.s32.totalorder %v338, 1
        %v347 = vsel %vm339, %v296, 0.0
        %v348 = vsel %vm340, %v297, 0.0
        %v349 = vsel %vm341, %v298, 0.0
        %v350 = vsel %vm342, %v299, 0.0
        %v351 = vsel %vm343, %v300, 0.0
        %v352 = vsel %vm344, %v301, 0.0
        %v353 = vsel %vm345, %v302, 0.0
        %v354 = vsel %vm346, %v303, 0.0
        %v355 = vld [vmem:[#allocation2] sm:$0x1]
        %v356 = vmul.f32 %v347, %v347
        %v357 = vmul.f32 %v348, %v348
        %v358 = vmul.f32 %v349, %v349
        %v359 = vmul.f32 %v350, %v350
        %v360 = vmul.f32 %v351, %v351
        %v361 = vmul.f32 %v352, %v352
        %v362 = vmul.f32 %v353, %v353
        %v363 = vmul.f32 %v354, %v354
        %vm364 = vcmask 261120
        %v365 = vsel %vm364, %v356, 0.0
        %v366 = vsel %vm364, %v357, 0.0
        %v367 = vadd.f32 %v365, %v366
        %v368 = vsel %vm364, %v358, 0.0
        %v369 = vadd.f32 %v367, %v368
        %v370 = vsel %vm364, %v359, 0.0
        %v371 = vadd.f32 %v369, %v370
        %v372 = vsel %vm364, %v360, 0.0
        %v373 = vadd.f32 %v371, %v372
        %v374 = vsel %vm364, %v361, 0.0
        %v375 = vadd.f32 %v373, %v374
        %v376 = vsel %vm364, %v362, 0.0
        %v377 = vadd.f32 %v375, %v376
        %v378 = vsel %vm364, %v363, 0.0
        %v379 = vadd.f32 %v377, %v378
        %v380 = vrot.slane %v379, 4
        %v381 = vadd.f32 %v379, %v380
        %v382 = vrot.slane %v381, 2
        %v383 = vadd.f32 %v381, %v382
        %v384 = vrot.slane %v383, 1
        %v385 = vadd.f32 %v383, %v384
        %v386 = vadd.f32 %v355, %v385
        %vm387 = vcmask 253952
        %388 = vst.msk [vmem:[#allocation2] sm:$0x1] %vm387, %v386
        %p389 = scmp.eq.s32.totalorder %s22, 2
        // Predicated region
        $region37: #{tpu_custom_call.1} parent=31 // pred_check
          %p390 = pneg %p389
        $region38: #{tpu_custom_call.1} parent=31 // pred_check_branch
          %392 = sbr.rel (%p390) target = $region40
        $region39: #{tpu_custom_call.1} parent=31 // pred_region
          %v393 = vld [vmem:[#allocation2] sm:$0x1]
          %394 = vst.msk [vmem:[%s196] sm:$0x1] %vm387, %v393
        $region40: #{tpu_custom_call.1} parent=31 // pred_fallthru
          _
        %s395 = sand.u32 %s112, 1
        %s396 = scalar_lea.sflag [#allocation4], %s395
        %s397 = sand.u32 %s112, 1
        %s398 = scalar_lea.vmem [#allocation3], %s397
        // Predicated region
        $region41: #{tpu_custom_call.1} parent=31 // pred_check
          %p399 = pneg %p122
        $region42: #{tpu_custom_call.1} parent=31 // pred_check_branch
          %401 = sbr.rel (%p399) target = $region44
        $region43: #{tpu_custom_call.1} parent=31 // pred_region
          %403 = vsyncadd %s396, 0
          %s404 = scalar_lea.hbm %s3, %s21
          %s406 = sshll.u32 %s398, 4
          %s407 = int_to_ptr.vmem [resolvable:$true] %s406
          %s408 = sshll.u32 %s404, 4
          %s409 = int_to_ptr.hbm [resolvable:$true] %s408
          %411 = dma.vmem_to_hbm [thread:$0]  %s407, 16, %s409, %s396
        $region44: #{tpu_custom_call.1} parent=31 // pred_fallthru
          _
      $region32: #{tpu_custom_call.1} parent=5 // pred_fallthru
        _
      %p412 = scmp.le.s32.totalorder 2, %s12
      // Predicated region
      $region45: #{tpu_custom_call.1} parent=5 // pred_check
        %p413 = pneg %p412
      $region46: #{tpu_custom_call.1} parent=5 // pred_check_branch
        %415 = sbr.rel (%p413) target = $region48
      $region47: #{tpu_custom_call.1} parent=5 // pred_region
        %s416 = ssub.s32 %s12, 2
        // Predicated region
        $region49: #{tpu_custom_call.1} parent=47 // pred_check
          %p417 = pneg %p128
        $region50: #{tpu_custom_call.1} parent=47 // pred_check_branch
          %419 = sbr.rel (%p417) target = $region52
        $region51: #{tpu_custom_call.1} parent=47 // pred_region
          %s420 = sand.u32 %s113, 1
          %s421 = scalar_lea.sflag [#allocation4], %s420
          %s422 = sand.u32 %s113, 1
          %s423 = scalar_lea.vmem [#allocation3], %s422
          %425 = dma.done %s421, 16
        $region52: #{tpu_custom_call.1} parent=47 // pred_fallthru
          _
      $region48: #{tpu_custom_call.1} parent=5 // pred_fallthru
        _
    $region6: #{tpu_custom_call.1} parent=1 // loop_footer
      %s16 = sadd.s32 1, %s12
    $region7: #{tpu_custom_call.1} parent=1 // loop_footer_branch
      %11 = sbr.rel target = $region3
    $region8: #{tpu_custom_call.1} parent=1 // loop_exit
      _
    %426 = vsyncpa [#allocation4], 1
    %s427 = scalar_lea.sflag [#allocation4], 1
    %428 = vsyncpa %s427, 1

</llo_original>
